<compile_context>
chip_gen: v6e
topology: v6e:2x2x1
jax: 0.10.0
libtpu: 0.0.40
codegen_flags: <defaults>
</compile_context>

<pallas_src>
import jax
import jax.numpy as jnp
from jax.experimental import pallas as pl
from jax.experimental.pallas import tpu as pltpu


# ----------------------------- generation config -----------------------------

def _tpu_budget():
    """(vmem_limit_bytes, fused_path_gate_bytes), derived from physical VMEM."""
    try:
        cap = int(pltpu.get_tpu_info().vmem_capacity_bytes)
    except Exception:
        cap = 64 * 1024 * 1024          # conservative (v7x-like) fallback
    vmem_limit = min((cap * 3) // 4, 96 * 1024 * 1024)   # 128MiB->96MiB, 64MiB->48MiB
    fused_gate = min((cap * 13) // 20, 88 * 1024 * 1024)  # 128MiB->~83MiB, 64MiB->~42MiB
    return vmem_limit, fused_gate


def _round_up(x, m):
    return ((x + m - 1) // m) * m


# --------------------------- fused path (small N) ---------------------------

def _gcn_fused_kernel(a_hbm_ref, x_ref, w0_ref, b0_ref, ws_ref, bs_ref,
                      o_ref, a_vmem, h_ref):
    # Single-buffer the O(N^2) adjacency: one DMA into a VMEM scratch.
    pltpu.sync_copy(a_hbm_ref, a_vmem)
    a = a_vmem[...]                                                    # bf16 [N, N]

    n_extra = ws_ref.shape[0]
    # Layer 0: feature transform then aggregation (bf16 MXU, f32 accumulation).
    xw = jnp.dot(x_ref[...], w0_ref[...], preferred_element_type=jnp.float32)
    h = jnp.maximum(
        jnp.dot(a, xw.astype(jnp.bfloat16), preferred_element_type=jnp.float32)
        + b0_ref[...], 0.0)
    if n_extra == 0:
        o_ref[...] = h.astype(o_ref.dtype)
        return
    h_ref[...] = h.astype(jnp.bfloat16)

    # Layers 1..L-1 (dropout == identity in eval mode).
    for l in range(n_extra):
        xw = jnp.dot(h_ref[...], ws_ref[l], preferred_element_type=jnp.float32)
        h = jnp.maximum(
            jnp.dot(a, xw.astype(jnp.bfloat16), preferred_element_type=jnp.float32)
            + bs_ref[l], 0.0)
        if l == n_extra - 1:
            o_ref[...] = h.astype(o_ref.dtype)
        else:
            h_ref[...] = h.astype(jnp.bfloat16)


def gcn_forward_fused(a_hat_bf16, features, params, *, vmem_limit):
    n, f_in = features.shape
    w0, b0 = params[0]
    n_hidden = w0.shape[1]
    ws = jnp.stack([w for (w, _) in params[1:]]).astype(jnp.bfloat16)   # (L-1, H, H)
    bs = jnp.stack([b for (_, b) in params[1:]])                        # (L-1, 1, H)
    n_extra = ws.shape[0]
    return pl.pallas_call(
        _gcn_fused_kernel,
        out_shape=jax.ShapeDtypeStruct((n, n_hidden), jnp.float32),
        grid_spec=pltpu.PrefetchScalarGridSpec(
            num_scalar_prefetch=0,
            grid=(1,),
            in_specs=[
                pl.BlockSpec(memory_space=pl.ANY),                         # A_hat (bf16, HBM)
                pl.BlockSpec((n, f_in), lambda i: (0, 0)),                 # features (bf16)
                pl.BlockSpec((f_in, n_hidden), lambda i: (0, 0)),          # W_0 (bf16)
                pl.BlockSpec((1, n_hidden), lambda i: (0, 0)),             # b_0 (f32)
                pl.BlockSpec((n_extra, n_hidden, n_hidden), lambda i: (0, 0, 0)),  # W_1..
                pl.BlockSpec((n_extra, 1, n_hidden), lambda i: (0, 0, 0)),         # b_1..
            ],
            out_specs=pl.BlockSpec((n, n_hidden), lambda i: (0, 0)),
            scratch_shapes=[
                pltpu.VMEM((n, n), jnp.bfloat16),          # A_hat, single-buffered
                pltpu.VMEM((n, n_hidden), jnp.bfloat16),   # inter-layer H
            ],
        ),
        compiler_params=pltpu.CompilerParams(
            dimension_semantics=("arbitrary",),
            vmem_limit_bytes=vmem_limit,
        ),
    )(a_hat_bf16, features.astype(jnp.bfloat16), w0.astype(jnp.bfloat16), b0, ws, bs)


# --------------------------- tiled path (large N) ---------------------------

def _aggregate_kernel(cnt_ref, cid_ref, a_ref, h_ref, w_ref, b_ref, o_ref, acc_ref):
    i = pl.program_id(0)
    k = pl.program_id(1)

    @pl.when(k == 0)
    def _():
        acc_ref[...] = jnp.zeros_like(acc_ref)

    # Skip compute for padded (empty) column tiles of this row tile. Their
    # block indices repeat the last real tile, so Pallas also skips the DMA.
    @pl.when(k < cnt_ref[i])
    def _():
        # Fused feature transform: XW tile recomputed in-kernel (tiny vs. A tile).
        xw = jnp.dot(h_ref[...], w_ref[...], preferred_element_type=jnp.float32)
        acc_ref[...] += jnp.dot(a_ref[...], xw.astype(jnp.bfloat16),
                                preferred_element_type=jnp.float32)

    @pl.when(k == pl.num_programs(1) - 1)
    def _():
        o_ref[...] = jnp.maximum(acc_ref[...] + b_ref[...], 0.0).astype(o_ref.dtype)


def _tile_occupancy(a_pad, tm, tk):
    """Per-row-tile nonzero column-tile lists (padded with repeats) + counts."""
    n_pad = a_pad.shape[0]
    r, c = n_pad // tm, n_pad // tk
    mask = jnp.any(a_pad.reshape(r, tm, c, tk) != 0, axis=(1, 3))       # (r, c)
    counts = mask.sum(axis=1).astype(jnp.int32)                         # (r,)
    cols = jnp.arange(c, dtype=jnp.int32)[None, :]
    key = jnp.where(mask, cols, cols + c)
    order = jnp.argsort(key, axis=1).astype(jnp.int32)                  # nonzero tiles first
    k_idx = jnp.minimum(jnp.arange(c, dtype=jnp.int32)[None, :],
                        jnp.maximum(counts[:, None] - 1, 0))
    col_ids = jnp.take_along_axis(order, k_idx, axis=1)                 # (r, c) int32
    return counts, col_ids


def _aggregate(counts, col_ids, a_pad, h, w_bf16, b, *, tm, tk, out_dtype, vmem_limit):
    """relu(A_hat @ (H @ W) + b) on a (row-tiles, col-tiles) grid, f32 VMEM acc."""
    n_pad = a_pad.shape[0]
    f_in = h.shape[1]
    f_out = w_bf16.shape[1]
    r, c = n_pad // tm, n_pad // tk
    return pl.pallas_call(
        _aggregate_kernel,
        out_shape=jax.ShapeDtypeStruct((n_pad, f_out), out_dtype),
        grid_spec=pltpu.PrefetchScalarGridSpec(
            num_scalar_prefetch=2,                                   # counts, col_ids
            grid=(r, c),
            in_specs=[
                pl.BlockSpec((tm, tk), lambda i, k, cnt, cid: (i, cid[i, k])),   # A_hat tile
                pl.BlockSpec((tk, f_in), lambda i, k, cnt, cid: (cid[i, k], 0)),  # H tile
                pl.BlockSpec((f_in, f_out), lambda i, k, cnt, cid: (0, 0)),       # W (full)
                pl.BlockSpec((1, f_out), lambda i, k, cnt, cid: (0, 0)),          # bias
            ],
            out_specs=pl.BlockSpec((tm, f_out), lambda i, k, cnt, cid: (i, 0)),
            scratch_shapes=[pltpu.VMEM((tm, f_out), jnp.float32)],
        ),
        compiler_params=pltpu.CompilerParams(
            dimension_semantics=("parallel", "arbitrary"),
            vmem_limit_bytes=vmem_limit,
        ),
    )(counts, col_ids, a_pad, h, w_bf16, b)


def _choose_tiles(n_pad, tm, tk):
    if tk is None:
        tk = n_pad if n_pad <= 2048 else next(
            t for t in (2048, 1024, 512, 256) if n_pad % t == 0)
    if tm is None:
        tm = n_pad if n_pad <= 1024 else next(
            t for t in (1024, 512, 256) if n_pad % t == 0)
        # v7x megacore: keep >= 2 row tiles so both TensorCores get work.
        if n_pad // tm < 2 and tm % 2 == 0 and tm // 2 >= 256:
            tm //= 2
    return tm, tk


def gcn_forward_tiled(a_hat_bf16, features, params, *, tm=None, tk=None, vmem_limit):
    n = a_hat_bf16.shape[0]
    n_pad = _round_up(n, 256)
    if tm is not None:
        n_pad = _round_up(n_pad, tm)
    if tk is not None:
        n_pad = _round_up(n_pad, tk)
    tm, tk = _choose_tiles(n_pad, tm, tk)

    pad = n_pad - n
    a_pad = jnp.pad(a_hat_bf16, ((0, pad), (0, pad))) if pad else a_hat_bf16
    h = jnp.pad(features, ((0, pad), (0, 0))) if pad else features
    h = h.astype(jnp.bfloat16)

    # Block-sparse structure of A_hat (computed once, shared by all layers).
    counts, col_ids = _tile_occupancy(a_pad, tm, tk)

    n_layers = len(params)
    for li, (w, b) in enumerate(params):
        # dropout (layers i != 0) is identity in eval mode.
        out_dtype = jnp.float32 if li == n_layers - 1 else jnp.bfloat16
        h = _aggregate(counts, col_ids, a_pad, h, w.astype(jnp.bfloat16), b,
                       tm=tm, tk=tk, out_dtype=out_dtype, vmem_limit=vmem_limit)
    return h[:n]


# --------------------------------- dispatcher ---------------------------------

def gcn_forward(a_hat, features, params, *, force_tiled=False, tm=None, tk=None):
    """GCN.forward (eval mode): h = features; per layer: [dropout=id]; GraphConv."""
    vmem_limit, fused_gate = _tpu_budget()
    a_bf16 = a_hat.astype(jnp.bfloat16)   # bf16 halves HBM/VMEM for the O(N^2) operand
    n, f_in = features.shape
    n_hidden = params[0][0].shape[1]
    n_layers = len(params)
    # Resident-VMEM estimate for the fused path (A single-buffered bf16 scratch,
    # bf16 H scratch, double-buffered features/weights/output + headroom).
    fused_est = (
        2 * n * n
        + 2 * n * n_hidden
        + 4 * n * f_in
        + 8 * n * n_hidden
        + 4 * (f_in * n_hidden + max(n_layers - 1, 0) * n_hidden * n_hidden)
        + (2 << 20)
    )
    if (not force_tiled) and n_layers >= 2 and fused_est < fused_gate:
        return gcn_forward_fused(a_bf16, features, params, vmem_limit=vmem_limit)
    return gcn_forward_tiled(a_bf16, features, params, tm=tm, tk=tk,
                             vmem_limit=vmem_limit)


def normalized_adjacency(adj):
    """A_hat = D^{-1/2} A D^{-1/2}, degree clamped to >= 1 (plain-JAX glue)."""
    deg = jnp.maximum(adj.sum(axis=1), 1.0)
    d_inv_sqrt = jax.lax.rsqrt(deg)
    return adj * d_inv_sqrt[:, None] * d_inv_sqrt[None, :]


# --------------------------------- demo / test ---------------------------------

def _make_graph(key, n):
    a_raw = (jax.random.uniform(key, (n, n)) < 0.05).astype(jnp.float32)
    a_sym = jnp.maximum(a_raw, a_raw.T) * (1.0 - jnp.eye(n, dtype=jnp.float32))
    return normalized_adjacency(a_sym)


def _reference(a_hat, features, params):
    h = features
    for (w, b) in params:
        h = jnp.maximum(a_hat @ (h @ w) + b, 0.0)
    return h


if __name__ == "__main__":
    in_feats = 32
    n_hidden = 32
    n_layers = 2   # total GraphConv layers (first in->hidden, rest hidden->hidden)

    key = jax.random.PRNGKey(0)
    k_adj, k_feat, k_adj2, k_feat2, *k_w = jax.random.split(key, 4 + 2 * n_layers)

    # Deterministic Glorot-ish parameters, shapes from __init__.
    params = []
    dims = [in_feats] + [n_hidden] * n_layers
    for li in range(n_layers):
        fin, fout = dims[li], dims[li + 1]
        scale = jnp.sqrt(2.0 / (fin + fout))
        w = jax.random.normal(k_w[2 * li], (fin, fout), dtype=jnp.float32) * scale
        b = jax.random.normal(k_w[2 * li + 1], (1, fout), dtype=jnp.float32) * 0.01
        params.append((w, b))

    # ---- small graph: fused single-kernel path ----
    N = 128
    a_hat = _make_graph(k_adj, N)
    features = jax.random.normal(k_feat, (N, in_feats), dtype=jnp.float32)

    out = jax.jit(lambda a, f: gcn_forward(a, f, params))(a_hat, features)
    out = jax.block_until_ready(out)
    ref = _reference(a_hat, features, params)
    assert out.shape == (N, n_hidden)
    assert jnp.allclose(out, ref, atol=5e-2, rtol=5e-2), float(jnp.max(jnp.abs(out - ref)))

    # ---- larger, non-tile-aligned graph: tiled path (padding + block-sparse skip) ----
    N2 = 600
    a_hat2 = _make_graph(k_adj2, N2)
    features2 = jax.random.normal(k_feat2, (N2, in_feats), dtype=jnp.float32)

    out2 = jax.jit(lambda a, f: gcn_forward(a, f, params, force_tiled=True))(a_hat2, features2)
    out2 = jax.block_until_ready(out2)
    ref2 = _reference(a_hat2, features2, params)
    assert out2.shape == (N2, n_hidden)
    assert jnp.allclose(out2, ref2, atol=5e-2, rtol=5e-2), float(jnp.max(jnp.abs(out2 - ref2)))

    print("KERNEL_OK")
</pallas_src>

<mosaic_0001>
module attributes {stable_mosaic.version = 11 : i64} {
  func.func @_gcn_fused_kernel(%arg0: i32, %arg1: memref<128x128xbf16, #tpu.memory_space<any>>, %arg2: memref<128x32xbf16, #tpu.memory_space<vmem>>, %arg3: memref<32x32xbf16, #tpu.memory_space<vmem>>, %arg4: memref<1x32xf32, #tpu.memory_space<vmem>>, %arg5: memref<1x32x32xbf16, #tpu.memory_space<vmem>>, %arg6: memref<1x1x32xf32, #tpu.memory_space<vmem>>, %arg7: memref<128x32xf32, #tpu.memory_space<vmem>>, %arg8: memref<128x128xbf16, #tpu.memory_space<vmem>>, %arg9: memref<128x32xbf16, #tpu.memory_space<vmem>>) attributes {dimension_semantics = [#tpu.dimension_semantics<arbitrary>], iteration_bounds = array<i64: 1>, scalar_prefetch = 0 : i64, scratch_operands = 2 : i64, tpu.core_type = #tpu.core_type<tc>, window_params = [{}, {pipeline_mode = #tpu.pipeline_mode<synchronous>, transform_indices = @transform_1, window_bounds = array<i64: 128, 32>}, {pipeline_mode = #tpu.pipeline_mode<synchronous>, transform_indices = @transform_2, window_bounds = array<i64: 32, 32>}, {pipeline_mode = #tpu.pipeline_mode<synchronous>, transform_indices = @transform_3, window_bounds = array<i64: 1, 32>}, {pipeline_mode = #tpu.pipeline_mode<synchronous>, transform_indices = @transform_4, window_bounds = array<i64: 1, 32, 32>}, {pipeline_mode = #tpu.pipeline_mode<synchronous>, transform_indices = @transform_5, window_bounds = array<i64: 1, 1, 32>}, {pipeline_mode = #tpu.pipeline_mode<synchronous>, transform_indices = @transform_6, window_bounds = array<i64: 128, 32>}]} {
    "tpu.region"() ({
      %26 = tpu.sem_alloc : memref<!tpu.dma_semaphore, #tpu.memory_space<semaphore_mem>>
      tpu.enqueue_dma source(%arg1 : memref<128x128xbf16, #tpu.memory_space<any>>) target(%arg8 : memref<128x128xbf16, #tpu.memory_space<vmem>>) target_semaphore(%26 : memref<!tpu.dma_semaphore, #tpu.memory_space<semaphore_mem>>)
      tpu.wait_dma2 semaphore(%26 : memref<!tpu.dma_semaphore, #tpu.memory_space<semaphore_mem>>) src(%arg1 : memref<128x128xbf16, #tpu.memory_space<any>>) dst(%arg8 : memref<128x128xbf16, #tpu.memory_space<vmem>>)
      tpu.yield
    }) : () -> ()
    %c0 = arith.constant 0 : index
    %c0_0 = arith.constant 0 : index
    %0 = vector.load %arg8[%c0, %c0_0] : memref<128x128xbf16, #tpu.memory_space<vmem>>, vector<128x128xbf16>
    %c0_1 = arith.constant 0 : index
    %c0_2 = arith.constant 0 : index
    %1 = vector.load %arg2[%c0_1, %c0_2] : memref<128x32xbf16, #tpu.memory_space<vmem>>, vector<128x32xbf16>
    %c0_3 = arith.constant 0 : index
    %c0_4 = arith.constant 0 : index
    %2 = vector.load %arg3[%c0_3, %c0_4] : memref<32x32xbf16, #tpu.memory_space<vmem>>, vector<32x32xbf16>
    %cst = arith.constant dense<0.000000e+00> : vector<128x32xf32>
    %3 = tpu.matmul %1, %2, %cst {dimension_numbers = #tpu.dot_dimension_numbers<[1], [0], [0], [1], [0, 0, 1, 1], [], []>} : vector<128x32xbf16>, vector<32x32xbf16>, vector<128x32xf32> -> vector<128x32xf32>
    %4 = arith.truncf %3 : vector<128x32xf32> to vector<128x32xbf16>
    %cst_5 = arith.constant dense<0.000000e+00> : vector<128x32xf32>
    %5 = tpu.matmul %0, %4, %cst_5 {dimension_numbers = #tpu.dot_dimension_numbers<[1], [0], [0], [1], [0, 0, 1, 1], [], []>} : vector<128x128xbf16>, vector<128x32xbf16>, vector<128x32xf32> -> vector<128x32xf32>
    %c0_6 = arith.constant 0 : index
    %c0_7 = arith.constant 0 : index
    %6 = vector.load %arg4[%c0_6, %c0_7] : memref<1x32xf32, #tpu.memory_space<vmem>>, vector<1x32xf32>
    %7 = vector.broadcast %6 : vector<1x32xf32> to vector<128x32xf32>
    %8 = arith.addf %5, %7 : vector<128x32xf32>
    %cst_8 = arith.constant 0.000000e+00 : f32
    %9 = vector.broadcast %cst_8 : f32 to vector<128x32xf32>
    %10 = arith.maximumf %8, %9 : vector<128x32xf32>
    %11 = arith.truncf %10 : vector<128x32xf32> to vector<128x32xbf16>
    %c0_9 = arith.constant 0 : index
    %c0_10 = arith.constant 0 : index
    %12 = vector.load %arg9[%c0_9, %c0_10] : memref<128x32xbf16, #tpu.memory_space<vmem>>, vector<128x32xbf16>
    tpu.vector_store %arg9[%c0_9, %c0_10], %11 {strides = array<i32>} : memref<128x32xbf16, #tpu.memory_space<vmem>>, vector<128x32xbf16>,
    %c0_11 = arith.constant 0 : index
    %c0_12 = arith.constant 0 : index
    %13 = vector.load %arg9[%c0_11, %c0_12] : memref<128x32xbf16, #tpu.memory_space<vmem>>, vector<128x32xbf16>
    %c0_13 = arith.constant 0 : index
    %c0_14 = arith.constant 0 : index
    %c0_15 = arith.constant 0 : index
    %14 = vector.load %arg5[%c0_13, %c0_14, %c0_15] : memref<1x32x32xbf16, #tpu.memory_space<vmem>>, vector<1x32x32xbf16>
    %15 = vector.shape_cast %14 : vector<1x32x32xbf16> to vector<32x32xbf16>
    %cst_16 = arith.constant dense<0.000000e+00> : vector<128x32xf32>
    %16 = tpu.matmul %13, %15, %cst_16 {dimension_numbers = #tpu.dot_dimension_numbers<[1], [0], [0], [1], [0, 0, 1, 1], [], []>} : vector<128x32xbf16>, vector<32x32xbf16>, vector<128x32xf32> -> vector<128x32xf32>
    %17 = arith.truncf %16 : vector<128x32xf32> to vector<128x32xbf16>
    %cst_17 = arith.constant dense<0.000000e+00> : vector<128x32xf32>
    %18 = tpu.matmul %0, %17, %cst_17 {dimension_numbers = #tpu.dot_dimension_numbers<[1], [0], [0], [1], [0, 0, 1, 1], [], []>} : vector<128x128xbf16>, vector<128x32xbf16>, vector<128x32xf32> -> vector<128x32xf32>
    %c0_18 = arith.constant 0 : index
    %c0_19 = arith.constant 0 : index
    %c0_20 = arith.constant 0 : index
    %19 = vector.load %arg6[%c0_18, %c0_19, %c0_20] : memref<1x1x32xf32, #tpu.memory_space<vmem>>, vector<1x1x32xf32>
    %20 = vector.shape_cast %19 : vector<1x1x32xf32> to vector<1x32xf32>
    %21 = vector.broadcast %20 : vector<1x32xf32> to vector<128x32xf32>
    %22 = arith.addf %18, %21 : vector<128x32xf32>
    %cst_21 = arith.constant 0.000000e+00 : f32
    %23 = vector.broadcast %cst_21 : f32 to vector<128x32xf32>
    %24 = arith.maximumf %22, %23 : vector<128x32xf32>
    %c0_22 = arith.constant 0 : index
    %c0_23 = arith.constant 0 : index
    %25 = vector.load %arg7[%c0_22, %c0_23] : memref<128x32xf32, #tpu.memory_space<vmem>>, vector<128x32xf32>
    tpu.vector_store %arg7[%c0_22, %c0_23], %24 {strides = array<i32>} : memref<128x32xf32, #tpu.memory_space<vmem>>, vector<128x32xf32>,
    return
  }
  func.func @transform_1(%arg0: i32) -> (i32, i32) {
    %c0_i32 = arith.constant 0 : i32
    %c0_i32_0 = arith.constant 0 : i32
    %c0_i32_1 = arith.constant 0 : i32
    return %c0_i32, %c0_i32_0 : i32, i32
  }
  func.func @transform_2(%arg0: i32) -> (i32, i32) {
    %c0_i32 = arith.constant 0 : i32
    %c0_i32_0 = arith.constant 0 : i32
    %c0_i32_1 = arith.constant 0 : i32
    return %c0_i32, %c0_i32_0 : i32, i32
  }
  func.func @transform_3(%arg0: i32) -> (i32, i32) {
    %c0_i32 = arith.constant 0 : i32
    %c0_i32_0 = arith.constant 0 : i32
    %c0_i32_1 = arith.constant 0 : i32
    return %c0_i32, %c0_i32_0 : i32, i32
  }
  func.func @transform_4(%arg0: i32) -> (i32, i32, i32) {
    %c0_i32 = arith.constant 0 : i32
    %c0_i32_0 = arith.constant 0 : i32
    %c0_i32_1 = arith.constant 0 : i32
    %c0_i32_2 = arith.constant 0 : i32
    return %c0_i32, %c0_i32_0, %c0_i32_1 : i32, i32, i32
  }
  func.func @transform_5(%arg0: i32) -> (i32, i32, i32) {
    %c0_i32 = arith.constant 0 : i32
    %c0_i32_0 = arith.constant 0 : i32
    %c0_i32_1 = arith.constant 0 : i32
    %c0_i32_2 = arith.constant 0 : i32
    return %c0_i32, %c0_i32_0, %c0_i32_1 : i32, i32, i32
  }
  func.func @transform_6(%arg0: i32) -> (i32, i32) {
    %c0_i32 = arith.constant 0 : i32
    %c0_i32_0 = arith.constant 0 : i32
    %c0_i32_1 = arith.constant 0 : i32
    return %c0_i32, %c0_i32_0 : i32, i32
  }
}

</mosaic_0001>

<llo_original>
// kernel: _lambda_.1
$region0: #{_lambda_.1}
  #allocation0 [shape = 'u32[]', space=smem, size = 0x4, offset = 0x4, fixed_abs, tag = 'smem constant byte address 0x4 - core index']
  #allocation1 [shape = 'u32[144,128]{1,0:T(1,128)}', space=vmem, size = 0x12000, scoped, tag = 'internal scratch']
  #allocation2 [shape = 'bf16[128,128]{1,0:T(8,128)(2,1)}', space=vmem, size = 0x8000, scoped, tag = 'scratch operand']
  #allocation3 [shape = 'bf16[128,32]{1,0:T(8,128)(2,1)}', space=vmem, size = 0x8000, scoped, tag = 'scratch operand']
  #allocation5 [shape = 's32[]', space=sflag, size = 0x4, offset = 0, fixed_abs, tag = 'sflag constant byte address 0x0 - dummy sync flag']
  %s0 = inlined_call_operand.vmem [shape: bf16[128,128], index: 0, kind: input, shape index: {}]
  %s1 = inlined_call_operand.vmem [shape: bf16[128,32], index: 1, kind: input, shape index: {}]
  %s2 = inlined_call_operand.vmem [shape: bf16[32,32], index: 2, kind: input, shape index: {}]
  %s3 = inlined_call_operand.vmem [shape: f32[1,32], index: 3, kind: input, shape index: {}]
  %s4 = inlined_call_operand.vmem [shape: bf16[1,32,32], index: 4, kind: input, shape index: {}]
  %s5 = inlined_call_operand.vmem [shape: f32[1,1,32], index: 5, kind: input, shape index: {}]
  %s6 = inlined_call_operand.vmem [shape: f32[128,32], index: 6, kind: output, shape index: {}]
  %s7 = sld [smem:[#allocation0]]
  $region65: #{_lambda_.1} parent=0
    _
  %s9 = ssub.s32 1, %s7
  %s10 = scalar_select 0, %s9, %s7
  // Predicated region
  $region2: #{_lambda_.1} parent=0 // pred_check
    _
  $region3: #{_lambda_.1} parent=0 // pred_check_branch
    %12 = sbr.rel (0) target = $region5
  $region4: #{_lambda_.1} parent=0 // pred_region
    _
  $region5: #{_lambda_.1} parent=0 // pred_fallthru
    _
  // Predicated region
  $region6: #{_lambda_.1} parent=0 // pred_check
    _
  $region7: #{_lambda_.1} parent=0 // pred_check_branch
    %14 = sbr.rel (0) target = $region9
  $region8: #{_lambda_.1} parent=0 // pred_region
    _
  $region9: #{_lambda_.1} parent=0 // pred_fallthru
    _
  // Predicated region
  $region10: #{_lambda_.1} parent=0 // pred_check
    _
  $region11: #{_lambda_.1} parent=0 // pred_check_branch
    %16 = sbr.rel (0) target = $region13
  $region12: #{_lambda_.1} parent=0 // pred_region
    _
  $region13: #{_lambda_.1} parent=0 // pred_fallthru
    _
  // Predicated region
  $region14: #{_lambda_.1} parent=0 // pred_check
    _
  $region15: #{_lambda_.1} parent=0 // pred_check_branch
    %18 = sbr.rel (0) target = $region17
  $region16: #{_lambda_.1} parent=0 // pred_region
    _
  $region17: #{_lambda_.1} parent=0 // pred_fallthru
    _
  // Predicated region
  $region18: #{_lambda_.1} parent=0 // pred_check
    _
  $region19: #{_lambda_.1} parent=0 // pred_check_branch
    %20 = sbr.rel (0) target = $region21
  $region20: #{_lambda_.1} parent=0 // pred_region
    _
  $region21: #{_lambda_.1} parent=0 // pred_fallthru
    _
  $region22: #{_lambda_.1} parent=0
    #allocation4 [shape = 's32[1]{0}', space=sflag, size = 0x4, scoped, tag = 'scoped memory for _lambda_.1']
    %p23 = scmp.lt.u32.totalorder 64, 8
    %p24 = pneg %p23
    // Predicated region
    $region23: #{_lambda_.1} parent=22 // pred_check
      _
    $region24: #{_lambda_.1} parent=22 // pred_check_branch
      %26 = sbr.rel (%p23) target = $region26
    $region25: #{_lambda_.1} parent=22 // pred_region
      %s42 = sand.u32 64, 7
      %p43 = scmp.eq.s32.totalorder %s42, 0
      // Predicated region
      $region38: #{_lambda_.1} parent=25 // pred_check
        %p44 = pneg %p43
      $region39: #{_lambda_.1} parent=25 // pred_check_branch
        %46 = sbr.rel (%p44) target = $region41
      $region40: #{_lambda_.1} parent=25 // pred_region
        loop: start=0, step=1, limit=1
        $region42: #{_lambda_.1} parent=40 // loop_pre_header
          _
        $region43: #{_lambda_.1} parent=40 // loop_header
          %s48 = sphi 0, %s52
          %p49 = scmp.ge.s32.totalorder %s48, 1
          %s53 = sphi %s0, %s0
          %s54 = sphi [#allocation2], [#allocation2]
        $region44: #{_lambda_.1} parent=40 // loop_header_branch
          %51 = sbr.rel (%p49) target = $region48
        $region45: #{_lambda_.1} parent=40 // loop_body
          %v55 = vld [vmem:[%s53] sm:$0xff]
          %56 = vst [vmem:[%s54] sm:$0xff] %v55
          %v57 = vld [vmem:[%s53 + $0x8] sm:$0xff]
          %58 = vst [vmem:[%s54 + $0x8] sm:$0xff] %v57
          %v59 = vld [vmem:[%s53 + $0x10] sm:$0xff]
          %60 = vst [vmem:[%s54 + $0x10] sm:$0xff] %v59
          %v61 = vld [vmem:[%s53 + $0x18] sm:$0xff]
          %62 = vst [vmem:[%s54 + $0x18] sm:$0xff] %v61
          %v63 = vld [vmem:[%s53 + $0x20] sm:$0xff]
          %64 = vst [vmem:[%s54 + $0x20] sm:$0xff] %v63
          %v65 = vld [vmem:[%s53 + $0x28] sm:$0xff]
          %66 = vst [vmem:[%s54 + $0x28] sm:$0xff] %v65
          %v67 = vld [vmem:[%s53 + $0x30] sm:$0xff]
          %68 = vst [vmem:[%s54 + $0x30] sm:$0xff] %v67
          %v69 = vld [vmem:[%s53 + $0x38] sm:$0xff]
          %70 = vst [vmem:[%s54 + $0x38] sm:$0xff] %v69
        $region46: #{_lambda_.1} parent=40 // loop_footer
          %s52 = sadd.s32 1, %s48
        $region47: #{_lambda_.1} parent=40 // loop_footer_branch
          %47 = sbr.rel target = $region43
        $region48: #{_lambda_.1} parent=40 // loop_exit
          _
      $region41: #{_lambda_.1} parent=25 // pred_fallthru
        _
      %p71 = pneg %p43
      // Predicated region
      $region49: #{_lambda_.1} parent=25 // pred_check
        _
      $region50: #{_lambda_.1} parent=25 // pred_check_branch
        %73 = sbr.rel (%p43) target = $region52
      $region51: #{_lambda_.1} parent=25 // pred_region
        %s74 = sand.u32 64, 7
      $region52: #{_lambda_.1} parent=25 // pred_fallthru
        _
    $region26: #{_lambda_.1} parent=22 // pred_fallthru
      _
    // Predicated region
    $region27: #{_lambda_.1} parent=22 // pred_check
      %p27 = pneg %p23
    $region28: #{_lambda_.1} parent=22 // pred_check_branch
      %29 = sbr.rel (%p27) target = $region30
    $region29: #{_lambda_.1} parent=22 // pred_region
      %s30 = sshll.u32 1, 64
      %s31 = ssub.s32 %s30, 1
      loop: start=0, step=1, limit=1
      $region31: #{_lambda_.1} parent=29 // loop_pre_header
        _
      $region32: #{_lambda_.1} parent=29 // loop_header
        %s33 = sphi 0, %s37
        %p34 = scmp.ge.s32.totalorder %s33, 1
        %s38 = sphi %s0, %s0
        %s39 = sphi [#allocation2], [#allocation2]
      $region33: #{_lambda_.1} parent=29 // loop_header_branch
        %36 = sbr.rel (%p34) target = $region37
      $region34: #{_lambda_.1} parent=29 // loop_body
        %v40 = vld [vmem:[%s38] sm:%s31]
        %41 = vst [vmem:[%s39] sm:%s31] %v40
      $region35: #{_lambda_.1} parent=29 // loop_footer
        %s37 = sadd.s32 1, %s33
      $region36: #{_lambda_.1} parent=29 // loop_footer_branch
        %32 = sbr.rel target = $region32
      $region37: #{_lambda_.1} parent=29 // loop_exit
        _
    $region30: #{_lambda_.1} parent=22 // pred_fallthru
      _
    // Predicated region
    $region53: #{_lambda_.1} parent=22 // pred_check
      _
    $region54: #{_lambda_.1} parent=22 // pred_check_branch
      %77 = sbr.rel (0) target = $region56
    $region55: #{_lambda_.1} parent=22 // pred_region
      %78 = vsyncadd [#allocation4], 1024
    $region56: #{_lambda_.1} parent=22 // pred_fallthru
      _
    %s79 = smul.u32 4, 16
    %s80 = smul.u32 %s79, 1
    %s81 = sshll.u32 %s80, 4
    %82 = dma.done [#allocation4], %s81
  %v83 = vld [vmem:[#allocation2] sm:$0xf]
  %v84 = vld [vmem:[#allocation2 + $0x4] sm:$0xf]
  %v85 = vld [vmem:[#allocation2 + $0x8] sm:$0xf]
  %v86 = vld [vmem:[#allocation2 + $0xc] sm:$0xf]
  %v87 = vld [vmem:[#allocation2 + $0x10] sm:$0xf]
  %v88 = vld [vmem:[#allocation2 + $0x14] sm:$0xf]
  %v89 = vld [vmem:[#allocation2 + $0x18] sm:$0xf]
  %v90 = vld [vmem:[#allocation2 + $0x1c] sm:$0xf]
  %v91 = vld [vmem:[#allocation2 + $0x20] sm:$0xf]
  %v92 = vld [vmem:[#allocation2 + $0x24] sm:$0xf]
  %v93 = vld [vmem:[#allocation2 + $0x28] sm:$0xf]
  %v94 = vld [vmem:[#allocation2 + $0x2c] sm:$0xf]
  %v95 = vld [vmem:[#allocation2 + $0x30] sm:$0xf]
  %v96 = vld [vmem:[#allocation2 + $0x34] sm:$0xf]
  %v97 = vld [vmem:[#allocation2 + $0x38] sm:$0xf]
  %v98 = vld [vmem:[#allocation2 + $0x3c] sm:$0xf]
  %v99 = vld [vmem:[%s1] sm:$0xf]
  %v100 = vld [vmem:[%s1 + $0x4] sm:$0xf]
  %v101 = vld [vmem:[%s1 + $0x8] sm:$0xf]
  %v102 = vld [vmem:[%s1 + $0xc] sm:$0xf]
  %v103 = vld [vmem:[%s1 + $0x10] sm:$0xf]
  %v104 = vld [vmem:[%s1 + $0x14] sm:$0xf]
  %v105 = vld [vmem:[%s1 + $0x18] sm:$0xf]
  %v106 = vld [vmem:[%s1 + $0x1c] sm:$0xf]
  %v107 = vld [vmem:[%s1 + $0x20] sm:$0xf]
  %v108 = vld [vmem:[%s1 + $0x24] sm:$0xf]
  %v109 = vld [vmem:[%s1 + $0x28] sm:$0xf]
  %v110 = vld [vmem:[%s1 + $0x2c] sm:$0xf]
  %v111 = vld [vmem:[%s1 + $0x30] sm:$0xf]
  %v112 = vld [vmem:[%s1 + $0x34] sm:$0xf]
  %v113 = vld [vmem:[%s1 + $0x38] sm:$0xf]
  %v114 = vld [vmem:[%s1 + $0x3c] sm:$0xf]
  %v115 = vld [vmem:[%s2] sm:$0xf]
  %v116 = vld [vmem:[%s2 + $0x4] sm:$0xf]
  %v117 = vld [vmem:[%s2 + $0x8] sm:$0xf]
  %v118 = vld [vmem:[%s2 + $0xc] sm:$0xf]
  %v135 = vunpack.c.l.b16 %v99
  %v136 = vunpack.c.l.b16 %v100
  %v137 = vunpack.c.l.b16 %v101
  %v138 = vunpack.c.l.b16 %v102
  %v139 = vunpack.c.l.b16 %v103
  %v140 = vunpack.c.l.b16 %v104
  %v141 = vunpack.c.l.b16 %v105
  %v142 = vunpack.c.l.b16 %v106
  %v143 = vunpack.c.l.b16 %v107
  %v144 = vunpack.c.l.b16 %v108
  %v145 = vunpack.c.l.b16 %v109
  %v146 = vunpack.c.l.b16 %v110
  %v147 = vunpack.c.l.b16 %v111
  %v148 = vunpack.c.l.b16 %v112
  %v149 = vunpack.c.l.b16 %v113
  %v150 = vunpack.c.l.b16 %v114
  %v151 = vpack.c.b16 %v136, %v135
  %v152 = vpack.c.b16 %v138, %v137
  %v153 = vpack.c.b16 %v140, %v139
  %v154 = vpack.c.b16 %v142, %v141
  %v155 = vpack.c.b16 %v144, %v143
  %v156 = vpack.c.b16 %v146, %v145
  %v157 = vpack.c.b16 %v148, %v147
  %v158 = vpack.c.b16 %v150, %v149
  %v163 = vunpack.c.l.b16 %v115
  %v164 = vunpack.c.l.b16 %v116
  %v165 = vunpack.c.l.b16 %v117
  %v166 = vunpack.c.l.b16 %v118
  %v167 = vpack.c.b16 %v164, %v163
  %v168 = vpack.c.b16 %v166, %v165
  %vm171 = vcmask 261120
  %v173 = vsel %vm171, %v151, 0
  %v176 = vsel %vm171, %v152, 0
  %v179 = vsel %vm171, %v153, 0
  %v182 = vsel %vm171, %v154, 0
  %v185 = vsel %vm171, %v155, 0
  %v188 = vsel %vm171, %v156, 0
  %v191 = vsel %vm171, %v157, 0
  %v194 = vsel %vm171, %v158, 0
  %196 = vmatprep.subr.bf16.mxu0 0
  %197 = vmatpush1.bf16.msra.mxu0 0
  %198 = vmatprep.subr.bf16.mxu0 0
  %199 = vmatpush1.bf16.msra.mxu0 0
  %200 = vmatprep.subr.bf16.mxu0 0
  %201 = vmatpush1.bf16.msra.mxu0 0
  %202 = vmatprep.subr.bf16.mxu0 0
  %203 = vmatpush1.bf16.msra.mxu0 0
  %204 = vmatprep.subr.bf16.mxu0 0
  %205 = vmatpush1.bf16.msra.mxu0 0
  %206 = vmatprep.subr.bf16.mxu0 0
  %207 = vmatpush1.bf16.msra.mxu0 0
  %208 = vmatprep.subr.bf16.mxu0 0
  %209 = vmatpush1.bf16.msra.mxu0 %v168
  %210 = vmatprep.subr.bf16.mxu0 0
  %211 = vmatpush1.bf16.msra.mxu0 %v167
  %212 = vmatprep.subr.bf16.mxu0 0
  %213 = vmatpush2.bf16.msra.mxu0 0
  %214 = vmatprep.subr.bf16.mxu0 0
  %215 = vmatpush2.bf16.msra.mxu0 0
  %216 = vmatprep.subr.bf16.mxu0 0
  %217 = vmatpush2.bf16.msra.mxu0 0
  %218 = vmatprep.subr.bf16.mxu0 0
  %219 = vmatpush2.bf16.msra.mxu0 0
  %220 = vmatprep.subr.bf16.mxu0 0
  %221 = vmatpush2.bf16.msra.mxu0 0
  %222 = vmatprep.subr.bf16.mxu0 0
  %223 = vmatpush2.bf16.msra.mxu0 0
  %224 = vmatprep.subr.bf16.mxu0 0
  %225 = vmatpush2.bf16.msra.mxu0 0
  %226 = vmatprep.subr.bf16.mxu0 0
  %227 = vmatpush2.bf16.msra.mxu0 0
  %228 = vmatprep.mubr.bf16.mxu0 0
  %229 = vmatmul.mubr.bf16.gmra.mxu0 %v173
  %v230 = vpop.f32.mrf.mxu0
  %v231 = vadd.f32 0.0, %v230
  %v232 = vpop.f32.mrf.mxu0
  %v233 = vpop.f32.mrf.mxu0
  %v234 = vadd.f32 0.0, %v233
  %v235 = vpop.f32.mrf.mxu0
  %236 = vmatprep.mubr.bf16.mxu0 0
  %237 = vmatmul.mubr.bf16.gmra.mxu0 %v176
  %v238 = vpop.f32.mrf.mxu0
  %v239 = vadd.f32 0.0, %v238
  %v240 = vpop.f32.mrf.mxu0
  %v241 = vpop.f32.mrf.mxu0
  %v242 = vadd.f32 0.0, %v241
  %v243 = vpop.f32.mrf.mxu0
  %244 = vmatprep.mubr.bf16.mxu0 0
  %245 = vmatmul.mubr.bf16.gmra.mxu0 %v179
  %v246 = vpop.f32.mrf.mxu0
  %v247 = vadd.f32 0.0, %v246
  %v248 = vpop.f32.mrf.mxu0
  %v249 = vpop.f32.mrf.mxu0
  %v250 = vadd.f32 0.0, %v249
  %v251 = vpop.f32.mrf.mxu0
  %252 = vmatprep.mubr.bf16.mxu0 0
  %253 = vmatmul.mubr.bf16.gmra.mxu0 %v182
  %v254 = vpop.f32.mrf.mxu0
  %v255 = vadd.f32 0.0, %v254
  %v256 = vpop.f32.mrf.mxu0
  %v257 = vpop.f32.mrf.mxu0
  %v258 = vadd.f32 0.0, %v257
  %v259 = vpop.f32.mrf.mxu0
  %260 = vmatprep.mubr.bf16.mxu0 0
  %261 = vmatmul.mubr.bf16.gmra.mxu0 %v185
  %v262 = vpop.f32.mrf.mxu0
  %v263 = vadd.f32 0.0, %v262
  %v264 = vpop.f32.mrf.mxu0
  %v265 = vpop.f32.mrf.mxu0
  %v266 = vadd.f32 0.0, %v265
  %v267 = vpop.f32.mrf.mxu0
  %268 = vmatprep.mubr.bf16.mxu0 0
  %269 = vmatmul.mubr.bf16.gmra.mxu0 %v188
  %v270 = vpop.f32.mrf.mxu0
  %v271 = vadd.f32 0.0, %v270
  %v272 = vpop.f32.mrf.mxu0
  %v273 = vpop.f32.mrf.mxu0
  %v274 = vadd.f32 0.0, %v273
  %v275 = vpop.f32.mrf.mxu0
  %276 = vmatprep.mubr.bf16.mxu0 0
  %277 = vmatmul.mubr.bf16.gmra.mxu0 %v191
  %v278 = vpop.f32.mrf.mxu0
  %v279 = vadd.f32 0.0, %v278
  %v280 = vpop.f32.mrf.mxu0
  %v281 = vpop.f32.mrf.mxu0
  %v282 = vadd.f32 0.0, %v281
  %v283 = vpop.f32.mrf.mxu0
  %284 = vmatprep.mubr.bf16.mxu0 0
  %285 = vmatmul.mubr.bf16.gmra.mxu0 %v194
  %v286 = vpop.f32.mrf.mxu0
  %v287 = vadd.f32 0.0, %v286
  %v288 = vpop.f32.mrf.mxu0
  %v289 = vpop.f32.mrf.mxu0
  %v290 = vadd.f32 0.0, %v289
  %v291 = vpop.f32.mrf.mxu0
  %292 = vdwg.mxu0
  %v293 = vpack.c.bf16 %v234, %v231
  %v294 = vpack.c.bf16 %v242, %v239
  %v295 = vpack.c.bf16 %v250, %v247
  %v296 = vpack.c.bf16 %v258, %v255
  %v297 = vpack.c.bf16 %v266, %v263
  %v298 = vpack.c.bf16 %v274, %v271
  %v299 = vpack.c.bf16 %v282, %v279
  %v300 = vpack.c.bf16 %v290, %v287
  %v301 = vld [vmem:[%s3] sm:$0x1]
  %v303 = vlaneseq
  %v304 = vshrl.u32 %v303, 7
  %v305 = vsub.s32 0, %v304
  %v306 = vrot.slane %v301, %v305
  %v324 = vunpack.c.l.b16 %v83
  %v325 = vunpack.c.l.b16 %v84
  %v326 = vunpack.c.l.b16 %v85
  %v327 = vunpack.c.l.b16 %v86
  %v328 = vunpack.c.l.b16 %v87
  %v329 = vunpack.c.l.b16 %v88
  %v330 = vunpack.c.l.b16 %v89
  %v331 = vunpack.c.l.b16 %v90
  %v332 = vunpack.c.l.b16 %v91
  %v333 = vunpack.c.l.b16 %v92
  %v334 = vunpack.c.l.b16 %v93
  %v335 = vunpack.c.l.b16 %v94
  %v336 = vunpack.c.l.b16 %v95
  %v337 = vunpack.c.l.b16 %v96
  %v338 = vunpack.c.l.b16 %v97
  %v339 = vunpack.c.l.b16 %v98
  %v340 = vpack.c.b16 %v325, %v324
  %v341 = vpack.c.b16 %v327, %v326
  %v342 = vpack.c.b16 %v329, %v328
  %v343 = vpack.c.b16 %v331, %v330
  %v344 = vpack.c.b16 %v333, %v332
  %v345 = vpack.c.b16 %v335, %v334
  %v346 = vpack.c.b16 %v337, %v336
  %v347 = vpack.c.b16 %v339, %v338
  %356 = vmatprep.subr.bf16.mxu0 0
  %357 = vmatpush1.bf16.msra.mxu0 %v300
  %358 = vmatprep.subr.bf16.mxu0 0
  %359 = vmatpush1.bf16.msra.mxu0 %v299
  %360 = vmatprep.subr.bf16.mxu0 0
  %361 = vmatpush1.bf16.msra.mxu0 %v298
  %362 = vmatprep.subr.bf16.mxu0 0
  %363 = vmatpush1.bf16.msra.mxu0 %v297
  %364 = vmatprep.subr.bf16.mxu0 0
  %365 = vmatpush1.bf16.msra.mxu0 %v296
  %366 = vmatprep.subr.bf16.mxu0 0
  %367 = vmatpush1.bf16.msra.mxu0 %v295
  %368 = vmatprep.subr.bf16.mxu0 0
  %369 = vmatpush1.bf16.msra.mxu0 %v294
  %370 = vmatprep.subr.bf16.mxu0 0
  %371 = vmatpush1.bf16.msra.mxu0 %v293
  %372 = vmatprep.subr.bf16.mxu0 0
  %373 = vmatpush2.bf16.msra.mxu0 0
  %374 = vmatprep.subr.bf16.mxu0 0
  %375 = vmatpush2.bf16.msra.mxu0 0
  %376 = vmatprep.subr.bf16.mxu0 0
  %377 = vmatpush2.bf16.msra.mxu0 0
  %378 = vmatprep.subr.bf16.mxu0 0
  %379 = vmatpush2.bf16.msra.mxu0 0
  %380 = vmatprep.subr.bf16.mxu0 0
  %381 = vmatpush2.bf16.msra.mxu0 0
  %382 = vmatprep.subr.bf16.mxu0 0
  %383 = vmatpush2.bf16.msra.mxu0 0
  %384 = vmatprep.subr.bf16.mxu0 0
  %385 = vmatpush2.bf16.msra.mxu0 0
  %386 = vmatprep.subr.bf16.mxu0 0
  %387 = vmatpush2.bf16.msra.mxu0 0
  %388 = vmatprep.mubr.bf16.mxu0 0
  %389 = vmatmul.mubr.bf16.gmra.mxu0 %v340
  %v390 = vpop.f32.mrf.mxu0
  %v391 = vadd.f32 %v306, %v390
  %v392 = vpop.f32.mrf.mxu0
  %v393 = vpop.f32.mrf.mxu0
  %v394 = vadd.f32 %v306, %v393
  %v395 = vpop.f32.mrf.mxu0
  %396 = vmatprep.mubr.bf16.mxu0 0
  %397 = vmatmul.mubr.bf16.gmra.mxu0 %v341
  %v398 = vpop.f32.mrf.mxu0
  %v399 = vadd.f32 %v306, %v398
  %v400 = vpop.f32.mrf.mxu0
  %v401 = vpop.f32.mrf.mxu0
  %v402 = vadd.f32 %v306, %v401
  %v403 = vpop.f32.mrf.mxu0
  %404 = vmatprep.mubr.bf16.mxu0 0
  %405 = vmatmul.mubr.bf16.gmra.mxu0 %v342
  %v406 = vpop.f32.mrf.mxu0
  %v407 = vadd.f32 %v306, %v406
  %v408 = vpop.f32.mrf.mxu0
  %v409 = vpop.f32.mrf.mxu0
  %v410 = vadd.f32 %v306, %v409
  %v411 = vpop.f32.mrf.mxu0
  %412 = vmatprep.mubr.bf16.mxu0 0
  %413 = vmatmul.mubr.bf16.gmra.mxu0 %v343
  %v414 = vpop.f32.mrf.mxu0
  %v415 = vadd.f32 %v306, %v414
  %v416 = vpop.f32.mrf.mxu0
  %v417 = vpop.f32.mrf.mxu0
  %v418 = vadd.f32 %v306, %v417
  %v419 = vpop.f32.mrf.mxu0
  %420 = vmatprep.mubr.bf16.mxu0 0
  %421 = vmatmul.mubr.bf16.gmra.mxu0 %v344
  %v422 = vpop.f32.mrf.mxu0
  %v423 = vadd.f32 %v306, %v422
  %v424 = vpop.f32.mrf.mxu0
  %v425 = vpop.f32.mrf.mxu0
  %v426 = vadd.f32 %v306, %v425
  %v427 = vpop.f32.mrf.mxu0
  %428 = vmatprep.mubr.bf16.mxu0 0
  %429 = vmatmul.mubr.bf16.gmra.mxu0 %v345
  %v430 = vpop.f32.mrf.mxu0
  %v431 = vadd.f32 %v306, %v430
  %v432 = vpop.f32.mrf.mxu0
  %v433 = vpop.f32.mrf.mxu0
  %v434 = vadd.f32 %v306, %v433
  %v435 = vpop.f32.mrf.mxu0
  %436 = vmatprep.mubr.bf16.mxu0 0
  %437 = vmatmul.mubr.bf16.gmra.mxu0 %v346
  %v438 = vpop.f32.mrf.mxu0
  %v439 = vadd.f32 %v306, %v438
  %v440 = vpop.f32.mrf.mxu0
  %v441 = vpop.f32.mrf.mxu0
  %v442 = vadd.f32 %v306, %v441
  %v443 = vpop.f32.mrf.mxu0
  %444 = vmatprep.mubr.bf16.mxu0 0
  %445 = vmatmul.mubr.bf16.gmra.mxu0 %v347
  %v446 = vpop.f32.mrf.mxu0
  %v447 = vadd.f32 %v306, %v446
  %v448 = vpop.f32.mrf.mxu0
  %v449 = vpop.f32.mrf.mxu0
  %v450 = vadd.f32 %v306, %v449
  %v451 = vpop.f32.mrf.mxu0
  %452 = vdwg.mxu0
  %v453 = vmax.f32 %v391, 0.0
  %v454 = vmax.f32 %v394, 0.0
  %v455 = vmax.f32 %v399, 0.0
  %v456 = vmax.f32 %v402, 0.0
  %v457 = vmax.f32 %v407, 0.0
  %v458 = vmax.f32 %v410, 0.0
  %v459 = vmax.f32 %v415, 0.0
  %v460 = vmax.f32 %v418, 0.0
  %v461 = vmax.f32 %v423, 0.0
  %v462 = vmax.f32 %v426, 0.0
  %v463 = vmax.f32 %v431, 0.0
  %v464 = vmax.f32 %v434, 0.0
  %v465 = vmax.f32 %v439, 0.0
  %v466 = vmax.f32 %v442, 0.0
  %v467 = vmax.f32 %v447, 0.0
  %v468 = vmax.f32 %v450, 0.0
  %v469 = vpack.c.bf16 %v454, %v453
  %v470 = vpack.c.bf16 %v456, %v455
  %v471 = vpack.c.bf16 %v458, %v457
  %v472 = vpack.c.bf16 %v460, %v459
  %v473 = vpack.c.bf16 %v462, %v461
  %v474 = vpack.c.bf16 %v464, %v463
  %v475 = vpack.c.bf16 %v466, %v465
  %v476 = vpack.c.bf16 %v468, %v467
  %v485 = vunpack.c.l.b16 %v469
  %v486 = vunpack.c.h.b16 %v469
  %v487 = vunpack.c.l.b16 %v470
  %v488 = vunpack.c.h.b16 %v470
  %v489 = vunpack.c.l.b16 %v471
  %v490 = vunpack.c.h.b16 %v471
  %v491 = vunpack.c.l.b16 %v472
  %v492 = vunpack.c.h.b16 %v472
  %v493 = vunpack.c.l.b16 %v473
  %v494 = vunpack.c.h.b16 %v473
  %v495 = vunpack.c.l.b16 %v474
  %v496 = vunpack.c.h.b16 %v474
  %v497 = vunpack.c.l.b16 %v475
  %v498 = vunpack.c.h.b16 %v475
  %v499 = vunpack.c.l.b16 %v476
  %v500 = vunpack.c.h.b16 %v476
  %v501 = vpack.c.b16 %v485, %v485
  %v502 = vpack.c.b16 %v486, %v486
  %v503 = vpack.c.b16 %v487, %v487
  %v504 = vpack.c.b16 %v488, %v488
  %v505 = vpack.c.b16 %v489, %v489
  %v506 = vpack.c.b16 %v490, %v490
  %v507 = vpack.c.b16 %v491, %v491
  %v508 = vpack.c.b16 %v492, %v492
  %v509 = vpack.c.b16 %v493, %v493
  %v510 = vpack.c.b16 %v494, %v494
  %v511 = vpack.c.b16 %v495, %v495
  %v512 = vpack.c.b16 %v496, %v496
  %v513 = vpack.c.b16 %v497, %v497
  %v514 = vpack.c.b16 %v498, %v498
  %v515 = vpack.c.b16 %v499, %v499
  %v516 = vpack.c.b16 %v500, %v500
  %vm533 = vcmask 257024
  %534 = vst.msk [vmem:[#allocation3] sm:$0xf] %vm533, %v501
  %535 = vst.msk [vmem:[#allocation3 + $0x4] sm:$0xf] %vm533, %v502
  %536 = vst.msk [vmem:[#allocation3 + $0x8] sm:$0xf] %vm533, %v503
  %537 = vst.msk [vmem:[#allocation3 + $0xc] sm:$0xf] %vm533, %v504
  %538 = vst.msk [vmem:[#allocation3 + $0x10] sm:$0xf] %vm533, %v505
  %539 = vst.msk [vmem:[#allocation3 + $0x14] sm:$0xf] %vm533, %v506
  %540 = vst.msk [vmem:[#allocation3 + $0x18] sm:$0xf] %vm533, %v507
  %541 = vst.msk [vmem:[#allocation3 + $0x1c] sm:$0xf] %vm533, %v508
  %542 = vst.msk [vmem:[#allocation3 + $0x20] sm:$0xf] %vm533, %v509
  %543 = vst.msk [vmem:[#allocation3 + $0x24] sm:$0xf] %vm533, %v510
  %544 = vst.msk [vmem:[#allocation3 + $0x28] sm:$0xf] %vm533, %v511
  %545 = vst.msk [vmem:[#allocation3 + $0x2c] sm:$0xf] %vm533, %v512
  %546 = vst.msk [vmem:[#allocation3 + $0x30] sm:$0xf] %vm533, %v513
  %547 = vst.msk [vmem:[#allocation3 + $0x34] sm:$0xf] %vm533, %v514
  %548 = vst.msk [vmem:[#allocation3 + $0x38] sm:$0xf] %vm533, %v515
  %549 = vst.msk [vmem:[#allocation3 + $0x3c] sm:$0xf] %vm533, %v516
  %v550 = vld [vmem:[#allocation3] sm:$0xf]
  %v551 = vld [vmem:[#allocation3 + $0x4] sm:$0xf]
  %v552 = vld [vmem:[#allocation3 + $0x8] sm:$0xf]
  %v553 = vld [vmem:[#allocation3 + $0xc] sm:$0xf]
  %v554 = vld [vmem:[#allocation3 + $0x10] sm:$0xf]
  %v555 = vld [vmem:[#allocation3 + $0x14] sm:$0xf]
  %v556 = vld [vmem:[#allocation3 + $0x18] sm:$0xf]
  %v557 = vld [vmem:[#allocation3 + $0x1c] sm:$0xf]
  %v558 = vld [vmem:[#allocation3 + $0x20] sm:$0xf]
  %v559 = vld [vmem:[#allocation3 + $0x24] sm:$0xf]
  %v560 = vld [vmem:[#allocation3 + $0x28] sm:$0xf]
  %v561 = vld [vmem:[#allocation3 + $0x2c] sm:$0xf]
  %v562 = vld [vmem:[#allocation3 + $0x30] sm:$0xf]
  %v563 = vld [vmem:[#allocation3 + $0x34] sm:$0xf]
  %v564 = vld [vmem:[#allocation3 + $0x38] sm:$0xf]
  %v565 = vld [vmem:[#allocation3 + $0x3c] sm:$0xf]
  %v566 = vld [vmem:[%s4] sm:$0xf]
  %v567 = vld [vmem:[%s4 + $0x4] sm:$0xf]
  %v568 = vld [vmem:[%s4 + $0x8] sm:$0xf]
  %v569 = vld [vmem:[%s4 + $0xc] sm:$0xf]
  %v586 = vunpack.c.l.b16 %v550
  %v587 = vunpack.c.l.b16 %v551
  %v588 = vunpack.c.l.b16 %v552
  %v589 = vunpack.c.l.b16 %v553
  %v590 = vunpack.c.l.b16 %v554
  %v591 = vunpack.c.l.b16 %v555
  %v592 = vunpack.c.l.b16 %v556
  %v593 = vunpack.c.l.b16 %v557
  %v594 = vunpack.c.l.b16 %v558
  %v595 = vunpack.c.l.b16 %v559
  %v596 = vunpack.c.l.b16 %v560
  %v597 = vunpack.c.l.b16 %v561
  %v598 = vunpack.c.l.b16 %v562
  %v599 = vunpack.c.l.b16 %v563
  %v600 = vunpack.c.l.b16 %v564
  %v601 = vunpack.c.l.b16 %v565
  %v602 = vpack.c.b16 %v587, %v586
  %v603 = vpack.c.b16 %v589, %v588
  %v604 = vpack.c.b16 %v591, %v590
  %v605 = vpack.c.b16 %v593, %v592
  %v606 = vpack.c.b16 %v595, %v594
  %v607 = vpack.c.b16 %v597, %v596
  %v608 = vpack.c.b16 %v599, %v598
  %v609 = vpack.c.b16 %v601, %v600
  %v614 = vunpack.c.l.b16 %v566
  %v615 = vunpack.c.l.b16 %v567
  %v616 = vunpack.c.l.b16 %v568
  %v617 = vunpack.c.l.b16 %v569
  %v618 = vpack.c.b16 %v615, %v614
  %v619 = vpack.c.b16 %v617, %v616
  %v623 = vsel %vm171, %v602, 0
  %v626 = vsel %vm171, %v603, 0
  %v629 = vsel %vm171, %v604, 0
  %v632 = vsel %vm171, %v605, 0
  %v635 = vsel %vm171, %v606, 0
  %v638 = vsel %vm171, %v607, 0
  %v641 = vsel %vm171, %v608, 0
  %v644 = vsel %vm171, %v609, 0
  %646 = vmatprep.subr.bf16.mxu0 0
  %647 = vmatpush1.bf16.msra.mxu0 0
  %648 = vmatprep.subr.bf16.mxu0 0
  %649 = vmatpush1.bf16.msra.mxu0 0
  %650 = vmatprep.subr.bf16.mxu0 0
  %651 = vmatpush1.bf16.msra.mxu0 0
  %652 = vmatprep.subr.bf16.mxu0 0
  %653 = vmatpush1.bf16.msra.mxu0 0
  %654 = vmatprep.subr.bf16.mxu0 0
  %655 = vmatpush1.bf16.msra.mxu0 0
  %656 = vmatprep.subr.bf16.mxu0 0
  %657 = vmatpush1.bf16.msra.mxu0 0
  %658 = vmatprep.subr.bf16.mxu0 0
  %659 = vmatpush1.bf16.msra.mxu0 %v619
  %660 = vmatprep.subr.bf16.mxu0 0
  %661 = vmatpush1.bf16.msra.mxu0 %v618
  %662 = vmatprep.subr.bf16.mxu0 0
  %663 = vmatpush2.bf16.msra.mxu0 0
  %664 = vmatprep.subr.bf16.mxu0 0
  %665 = vmatpush2.bf16.msra.mxu0 0
  %666 = vmatprep.subr.bf16.mxu0 0
  %667 = vmatpush2.bf16.msra.mxu0 0
  %668 = vmatprep.subr.bf16.mxu0 0
  %669 = vmatpush2.bf16.msra.mxu0 0
  %670 = vmatprep.subr.bf16.mxu0 0
  %671 = vmatpush2.bf16.msra.mxu0 0
  %672 = vmatprep.subr.bf16.mxu0 0
  %673 = vmatpush2.bf16.msra.mxu0 0
  %674 = vmatprep.subr.bf16.mxu0 0
  %675 = vmatpush2.bf16.msra.mxu0 0
  %676 = vmatprep.subr.bf16.mxu0 0
  %677 = vmatpush2.bf16.msra.mxu0 0
  %678 = vmatprep.mubr.bf16.mxu0 0
  %679 = vmatmul.mubr.bf16.gmra.mxu0 %v623
  %v680 = vpop.f32.mrf.mxu0
  %v681 = vadd.f32 0.0, %v680
  %v682 = vpop.f32.mrf.mxu0
  %v683 = vpop.f32.mrf.mxu0
  %v684 = vadd.f32 0.0, %v683
  %v685 = vpop.f32.mrf.mxu0
  %686 = vmatprep.mubr.bf16.mxu0 0
  %687 = vmatmul.mubr.bf16.gmra.mxu0 %v626
  %v688 = vpop.f32.mrf.mxu0
  %v689 = vadd.f32 0.0, %v688
  %v690 = vpop.f32.mrf.mxu0
  %v691 = vpop.f32.mrf.mxu0
  %v692 = vadd.f32 0.0, %v691
  %v693 = vpop.f32.mrf.mxu0
  %694 = vmatprep.mubr.bf16.mxu0 0
  %695 = vmatmul.mubr.bf16.gmra.mxu0 %v629
  %v696 = vpop.f32.mrf.mxu0
  %v697 = vadd.f32 0.0, %v696
  %v698 = vpop.f32.mrf.mxu0
  %v699 = vpop.f32.mrf.mxu0
  %v700 = vadd.f32 0.0, %v699
  %v701 = vpop.f32.mrf.mxu0
  %702 = vmatprep.mubr.bf16.mxu0 0
  %703 = vmatmul.mubr.bf16.gmra.mxu0 %v632
  %v704 = vpop.f32.mrf.mxu0
  %v705 = vadd.f32 0.0, %v704
  %v706 = vpop.f32.mrf.mxu0
  %v707 = vpop.f32.mrf.mxu0
  %v708 = vadd.f32 0.0, %v707
  %v709 = vpop.f32.mrf.mxu0
  %710 = vmatprep.mubr.bf16.mxu0 0
  %711 = vmatmul.mubr.bf16.gmra.mxu0 %v635
  %v712 = vpop.f32.mrf.mxu0
  %v713 = vadd.f32 0.0, %v712
  %v714 = vpop.f32.mrf.mxu0
  %v715 = vpop.f32.mrf.mxu0
  %v716 = vadd.f32 0.0, %v715
  %v717 = vpop.f32.mrf.mxu0
  %718 = vmatprep.mubr.bf16.mxu0 0
  %719 = vmatmul.mubr.bf16.gmra.mxu0 %v638
  %v720 = vpop.f32.mrf.mxu0
  %v721 = vadd.f32 0.0, %v720
  %v722 = vpop.f32.mrf.mxu0
  %v723 = vpop.f32.mrf.mxu0
  %v724 = vadd.f32 0.0, %v723
  %v725 = vpop.f32.mrf.mxu0
  %726 = vmatprep.mubr.bf16.mxu0 0
  %727 = vmatmul.mubr.bf16.gmra.mxu0 %v641
  %v728 = vpop.f32.mrf.mxu0
  %v729 = vadd.f32 0.0, %v728
  %v730 = vpop.f32.mrf.mxu0
  %v731 = vpop.f32.mrf.mxu0
  %v732 = vadd.f32 0.0, %v731
  %v733 = vpop.f32.mrf.mxu0
  %734 = vmatprep.mubr.bf16.mxu0 0
  %735 = vmatmul.mubr.bf16.gmra.mxu0 %v644
  %v736 = vpop.f32.mrf.mxu0
  %v737 = vadd.f32 0.0, %v736
  %v738 = vpop.f32.mrf.mxu0
  %v739 = vpop.f32.mrf.mxu0
  %v740 = vadd.f32 0.0, %v739
  %v741 = vpop.f32.mrf.mxu0
  %742 = vdwg.mxu0
  %v743 = vpack.c.bf16 %v684, %v681
  %v744 = vpack.c.bf16 %v692, %v689
  %v745 = vpack.c.bf16 %v700, %v697
  %v746 = vpack.c.bf16 %v708, %v705
  %v747 = vpack.c.bf16 %v716, %v713
  %v748 = vpack.c.bf16 %v724, %v721
  %v749 = vpack.c.bf16 %v732, %v729
  %v750 = vpack.c.bf16 %v740, %v737
  %v751 = vld [vmem:[%s5] sm:$0x1]
  %v753 = vlaneseq
  %v754 = vshrl.u32 %v753, 7
  %v755 = vsub.s32 0, %v754
  %v756 = vrot.slane %v751, %v755
  %758 = vmatprep.subr.bf16.mxu0 0
  %759 = vmatpush1.bf16.msra.mxu0 %v750
  %760 = vmatprep.subr.bf16.mxu0 0
  %761 = vmatpush1.bf16.msra.mxu0 %v749
  %762 = vmatprep.subr.bf16.mxu0 0
  %763 = vmatpush1.bf16.msra.mxu0 %v748
  %764 = vmatprep.subr.bf16.mxu0 0
  %765 = vmatpush1.bf16.msra.mxu0 %v747
  %766 = vmatprep.subr.bf16.mxu0 0
  %767 = vmatpush1.bf16.msra.mxu0 %v746
  %768 = vmatprep.subr.bf16.mxu0 0
  %769 = vmatpush1.bf16.msra.mxu0 %v745
  %770 = vmatprep.subr.bf16.mxu0 0
  %771 = vmatpush1.bf16.msra.mxu0 %v744
  %772 = vmatprep.subr.bf16.mxu0 0
  %773 = vmatpush1.bf16.msra.mxu0 %v743
  %774 = vmatprep.subr.bf16.mxu0 0
  %775 = vmatpush2.bf16.msra.mxu0 0
  %776 = vmatprep.subr.bf16.mxu0 0
  %777 = vmatpush2.bf16.msra.mxu0 0
  %778 = vmatprep.subr.bf16.mxu0 0
  %779 = vmatpush2.bf16.msra.mxu0 0
  %780 = vmatprep.subr.bf16.mxu0 0
  %781 = vmatpush2.bf16.msra.mxu0 0
  %782 = vmatprep.subr.bf16.mxu0 0
  %783 = vmatpush2.bf16.msra.mxu0 0
  %784 = vmatprep.subr.bf16.mxu0 0
  %785 = vmatpush2.bf16.msra.mxu0 0
  %786 = vmatprep.subr.bf16.mxu0 0
  %787 = vmatpush2.bf16.msra.mxu0 0
  %788 = vmatprep.subr.bf16.mxu0 0
  %789 = vmatpush2.bf16.msra.mxu0 0
  %790 = vmatprep.mubr.bf16.mxu0 0
  %791 = vmatmul.mubr.bf16.gmra.mxu0 %v340
  %v792 = vpop.f32.mrf.mxu0
  %v793 = vadd.f32 %v756, %v792
  %v794 = vpop.f32.mrf.mxu0
  %v795 = vpop.f32.mrf.mxu0
  %v796 = vadd.f32 %v756, %v795
  %v797 = vpop.f32.mrf.mxu0
  %798 = vmatprep.mubr.bf16.mxu0 0
  %799 = vmatmul.mubr.bf16.gmra.mxu0 %v341
  %v800 = vpop.f32.mrf.mxu0
  %v801 = vadd.f32 %v756, %v800
  %v802 = vpop.f32.mrf.mxu0
  %v803 = vpop.f32.mrf.mxu0
  %v804 = vadd.f32 %v756, %v803
  %v805 = vpop.f32.mrf.mxu0
  %806 = vmatprep.mubr.bf16.mxu0 0
  %807 = vmatmul.mubr.bf16.gmra.mxu0 %v342
  %v808 = vpop.f32.mrf.mxu0
  %v809 = vadd.f32 %v756, %v808
  %v810 = vpop.f32.mrf.mxu0
  %v811 = vpop.f32.mrf.mxu0
  %v812 = vadd.f32 %v756, %v811
  %v813 = vpop.f32.mrf.mxu0
  %814 = vmatprep.mubr.bf16.mxu0 0
  %815 = vmatmul.mubr.bf16.gmra.mxu0 %v343
  %v816 = vpop.f32.mrf.mxu0
  %v817 = vadd.f32 %v756, %v816
  %v818 = vpop.f32.mrf.mxu0
  %v819 = vpop.f32.mrf.mxu0
  %v820 = vadd.f32 %v756, %v819
  %v821 = vpop.f32.mrf.mxu0
  %822 = vmatprep.mubr.bf16.mxu0 0
  %823 = vmatmul.mubr.bf16.gmra.mxu0 %v344
  %v824 = vpop.f32.mrf.mxu0
  %v825 = vadd.f32 %v756, %v824
  %v826 = vpop.f32.mrf.mxu0
  %v827 = vpop.f32.mrf.mxu0
  %v828 = vadd.f32 %v756, %v827
  %v829 = vpop.f32.mrf.mxu0
  %830 = vmatprep.mubr.bf16.mxu0 0
  %831 = vmatmul.mubr.bf16.gmra.mxu0 %v345
  %v832 = vpop.f32.mrf.mxu0
  %v833 = vadd.f32 %v756, %v832
  %v834 = vpop.f32.mrf.mxu0
  %v835 = vpop.f32.mrf.mxu0
  %v836 = vadd.f32 %v756, %v835
  %v837 = vpop.f32.mrf.mxu0
  %838 = vmatprep.mubr.bf16.mxu0 0
  %839 = vmatmul.mubr.bf16.gmra.mxu0 %v346
  %v840 = vpop.f32.mrf.mxu0
  %v841 = vadd.f32 %v756, %v840
  %v842 = vpop.f32.mrf.mxu0
  %v843 = vpop.f32.mrf.mxu0
  %v844 = vadd.f32 %v756, %v843
  %v845 = vpop.f32.mrf.mxu0
  %846 = vmatprep.mubr.bf16.mxu0 0
  %847 = vmatmul.mubr.bf16.gmra.mxu0 %v347
  %v848 = vpop.f32.mrf.mxu0
  %v849 = vadd.f32 %v756, %v848
  %v850 = vpop.f32.mrf.mxu0
  %v851 = vpop.f32.mrf.mxu0
  %v852 = vadd.f32 %v756, %v851
  %v853 = vpop.f32.mrf.mxu0
  %854 = vdwg.mxu0
  %v855 = vmax.f32 %v793, 0.0
  %v856 = vmax.f32 %v796, 0.0
  %v857 = vmax.f32 %v801, 0.0
  %v858 = vmax.f32 %v804, 0.0
  %v859 = vmax.f32 %v809, 0.0
  %v860 = vmax.f32 %v812, 0.0
  %v861 = vmax.f32 %v817, 0.0
  %v862 = vmax.f32 %v820, 0.0
  %v863 = vmax.f32 %v825, 0.0
  %v864 = vmax.f32 %v828, 0.0
  %v865 = vmax.f32 %v833, 0.0
  %v866 = vmax.f32 %v836, 0.0
  %v867 = vmax.f32 %v841, 0.0
  %v868 = vmax.f32 %v844, 0.0
  %v869 = vmax.f32 %v849, 0.0
  %v870 = vmax.f32 %v852, 0.0
  %871 = vst.msk [vmem:[%s6] sm:$0xff] %vm171, %v855
  %872 = vst.msk [vmem:[%s6 + $0x8] sm:$0xff] %vm171, %v856
  %873 = vst.msk [vmem:[%s6 + $0x10] sm:$0xff] %vm171, %v857
  %874 = vst.msk [vmem:[%s6 + $0x18] sm:$0xff] %vm171, %v858
  %875 = vst.msk [vmem:[%s6 + $0x20] sm:$0xff] %vm171, %v859
  %876 = vst.msk [vmem:[%s6 + $0x28] sm:$0xff] %vm171, %v860
  %877 = vst.msk [vmem:[%s6 + $0x30] sm:$0xff] %vm171, %v861
  %878 = vst.msk [vmem:[%s6 + $0x38] sm:$0xff] %vm171, %v862
  %879 = vst.msk [vmem:[%s6 + $0x40] sm:$0xff] %vm171, %v863
  %880 = vst.msk [vmem:[%s6 + $0x48] sm:$0xff] %vm171, %v864
  %881 = vst.msk [vmem:[%s6 + $0x50] sm:$0xff] %vm171, %v865
  %882 = vst.msk [vmem:[%s6 + $0x58] sm:$0xff] %vm171, %v866
  %883 = vst.msk [vmem:[%s6 + $0x60] sm:$0xff] %vm171, %v867
  %884 = vst.msk [vmem:[%s6 + $0x68] sm:$0xff] %vm171, %v868
  %885 = vst.msk [vmem:[%s6 + $0x70] sm:$0xff] %vm171, %v869
  %886 = vst.msk [vmem:[%s6 + $0x78] sm:$0xff] %vm171, %v870
  // Predicated region
  $region57: #{_lambda_.1} parent=0 // pred_check
    _
  $region58: #{_lambda_.1} parent=0 // pred_check_branch
    %888 = sbr.rel (0) target = $region60
  $region59: #{_lambda_.1} parent=0 // pred_region
    _
  $region60: #{_lambda_.1} parent=0 // pred_fallthru
    _
  // Predicated region
  $region61: #{_lambda_.1} parent=0 // pred_check
    _
  $region62: #{_lambda_.1} parent=0 // pred_check_branch
    %890 = sbr.rel (0) target = $region64
  $region63: #{_lambda_.1} parent=0 // pred_region
    _
  $region64: #{_lambda_.1} parent=0 // pred_fallthru
    _

</llo_original>
